<compile_context>
chip_gen: v5e
topology: v5e:2x2
jax: 0.10.0
libtpu: 0.0.40
codegen_flags: <defaults>
</compile_context>

<pallas_src>
import jax
import jax.numpy as jnp
from jax.experimental import pallas as pl
from jax.experimental.pallas import tpu as pltpu


def _round_up(n: int, m: int) -> int:
    return ((n + m - 1) // m) * m


def mlp_kernel(x_ref, w1_ref, b1_ref, w2_ref, b2_ref, o_ref):
    # Hidden layer on the MXU: (TILE_B, 38) @ (38, 10) + (1, 10), ReLU.
    h = jnp.dot(x_ref[...], w1_ref[...], preferred_element_type=jnp.float32)
    h = jnp.maximum(h + b1_ref[...], 0.0)
    # Dropout(0.5) -> identity in eval mode.
    # Output layer also on the MXU: (TILE_B, 10) @ (10, 1) — one extra vmatmul
    # push per 8 rows instead of a cross-lane XLU reduce.
    out = jnp.dot(h, w2_ref[...], preferred_element_type=jnp.float32)
    # b2 is a scalar held in SMEM.
    o_ref[...] = out + b2_ref[0, 0]


def nn_forward(x, w1, b1, w2, b2, *, tile_b=8192):
    """x: (B, 38) f32; w1: (10, 38); b1: (10,); w2: (1, 10); b2: (1,)."""
    B, d_in = x.shape
    d_hid = w1.shape[0]
    d_out = w2.shape[0]

    # Glue (not hot path): transpose / reshape params once.
    w1t = jnp.transpose(w1).astype(jnp.float32)      # (38, 10)
    b1r = b1.reshape(1, d_hid).astype(jnp.float32)   # (1, 10)
    w2t = jnp.transpose(w2).astype(jnp.float32)      # (10, 1)
    b2r = b2.reshape(1, 1).astype(jnp.float32)       # (1, 1) -> SMEM scalar
    x = x.astype(jnp.float32)

    # Batch tile: multiple of 8 (sublane); clamp for tiny batches.  The grid is
    # cdiv-sized, so B need not divide tile_b — Pallas clips the ragged last
    # block on writeback (garbage rows of the last input block are computed
    # but never stored).
    tile_b = min(tile_b, _round_up(B, 8))
    grid = (pl.cdiv(B, tile_b),)

    out = pl.pallas_call(
        mlp_kernel,
        out_shape=jax.ShapeDtypeStruct((B, d_out), jnp.float32),
        grid_spec=pltpu.PrefetchScalarGridSpec(
            num_scalar_prefetch=0,
            grid=grid,
            in_specs=[
                # x: tiled over batch, double-buffered pipeline.
                pl.BlockSpec((tile_b, d_in), lambda i: (i, 0)),
                # Weights / hidden bias: resident in VMEM (constant block idx).
                pl.BlockSpec((d_in, d_hid), lambda i: (0, 0)),
                pl.BlockSpec((1, d_hid), lambda i: (0, 0)),
                pl.BlockSpec((d_hid, d_out), lambda i: (0, 0)),
                # Output bias: scalar in SMEM.
                pl.BlockSpec(memory_space=pltpu.MemorySpace.SMEM),
            ],
            out_specs=pl.BlockSpec((tile_b, d_out), lambda i: (i, 0)),
        ),
        compiler_params=pltpu.CompilerParams(
            dimension_semantics=("parallel",),
            # ~2.5 KiB effective VMEM per row (lane-padded x/out double buffers
            # + padded h temp): 8192 rows ~ 20-24 MiB; 48 MiB leaves headroom
            # on every generation (v7x physical VMEM is 64 MiB per TC).
            vmem_limit_bytes=48 * 1024 * 1024,
        ),
    )(x, w1t, b1r, w2t, b2r)

    return out


def _reference(x, w1, b1, w2, b2):
    h = jnp.maximum(x @ w1.T + b1, 0.0)
    return h @ w2.T + b2


if __name__ == "__main__":
    key = jax.random.PRNGKey(0)
    kx, k1, k2, k3, k4 = jax.random.split(key, 5)

    # Small shapes consistent with the module; B=13 also exercises the ragged
    # (clipped) last-block handling.
    B, D_IN, D_HID, D_OUT = 13, 38, 10, 1

    x = jax.random.normal(kx, (B, D_IN), dtype=jnp.float32)
    # Deterministic parameter init (mimics Linear's uniform(-1/sqrt(fan_in), ..))
    lim1 = 1.0 / jnp.sqrt(D_IN)
    lim2 = 1.0 / jnp.sqrt(D_HID)
    w1 = jax.random.uniform(k1, (D_HID, D_IN), jnp.float32, -lim1, lim1)
    b1 = jax.random.uniform(k2, (D_HID,), jnp.float32, -lim1, lim1)
    w2 = jax.random.uniform(k3, (D_OUT, D_HID), jnp.float32, -lim2, lim2)
    b2 = jax.random.uniform(k4, (D_OUT,), jnp.float32, -lim2, lim2)

    out = nn_forward(x, w1, b1, w2, b2)
    out = jax.block_until_ready(out)

    ref = _reference(x, w1, b1, w2, b2)
    assert out.shape == (B, D_OUT), out.shape
    assert jnp.allclose(out, ref, atol=1e-5, rtol=1e-5), "mismatch vs reference"

    print("KERNEL_OK")
</pallas_src>

<mosaic_0001>
module attributes {stable_mosaic.version = 11 : i64} {
  func.func @mlp_kernel(%arg0: i32, %arg1: memref<16x38xf32, #tpu.memory_space<vmem>>, %arg2: memref<38x10xf32, #tpu.memory_space<vmem>>, %arg3: memref<1x10xf32, #tpu.memory_space<vmem>>, %arg4: memref<10x1xf32, #tpu.memory_space<vmem>>, %arg5: memref<1x1xf32, #tpu.memory_space<smem>>, %arg6: memref<16x1xf32, #tpu.memory_space<vmem>>) attributes {dimension_semantics = [#tpu.dimension_semantics<parallel>], iteration_bounds = array<i64: 1>, scalar_prefetch = 0 : i64, scratch_operands = 0 : i64, tpu.core_type = #tpu.core_type<tc>, window_params = [{transform_indices = @transform_0, window_bounds = array<i64: 16, 38>}, {pipeline_mode = #tpu.pipeline_mode<synchronous>, transform_indices = @transform_1, window_bounds = array<i64: 38, 10>}, {pipeline_mode = #tpu.pipeline_mode<synchronous>, transform_indices = @transform_2, window_bounds = array<i64: 1, 10>}, {pipeline_mode = #tpu.pipeline_mode<synchronous>, transform_indices = @transform_3, window_bounds = array<i64: 10, 1>}, {transform_indices = @transform_4, window_bounds = array<i64: 1, 1>}, {transform_indices = @transform_5, window_bounds = array<i64: 16, 1>}]} {
    %c0 = arith.constant 0 : index
    %c0_0 = arith.constant 0 : index
    %0 = vector.load %arg1[%c0, %c0_0] : memref<16x38xf32, #tpu.memory_space<vmem>>, vector<16x38xf32>
    %c0_1 = arith.constant 0 : index
    %c0_2 = arith.constant 0 : index
    %1 = vector.load %arg2[%c0_1, %c0_2] : memref<38x10xf32, #tpu.memory_space<vmem>>, vector<38x10xf32>
    %cst = arith.constant dense<0.000000e+00> : vector<16x10xf32>
    %2 = tpu.matmul %0, %1, %cst {dimension_numbers = #tpu.dot_dimension_numbers<[1], [0], [0], [1], [0, 0, 1, 1], [], []>} : vector<16x38xf32>, vector<38x10xf32>, vector<16x10xf32> -> vector<16x10xf32>
    %c0_3 = arith.constant 0 : index
    %c0_4 = arith.constant 0 : index
    %3 = vector.load %arg3[%c0_3, %c0_4] : memref<1x10xf32, #tpu.memory_space<vmem>>, vector<1x10xf32>
    %4 = vector.broadcast %3 : vector<1x10xf32> to vector<16x10xf32>
    %5 = arith.addf %2, %4 : vector<16x10xf32>
    %cst_5 = arith.constant 0.000000e+00 : f32
    %6 = vector.broadcast %cst_5 : f32 to vector<16x10xf32>
    %7 = arith.maximumf %5, %6 : vector<16x10xf32>
    %c0_6 = arith.constant 0 : index
    %c0_7 = arith.constant 0 : index
    %8 = vector.load %arg4[%c0_6, %c0_7] : memref<10x1xf32, #tpu.memory_space<vmem>>, vector<10x1xf32>
    %cst_8 = arith.constant dense<0.000000e+00> : vector<16x1xf32>
    %9 = tpu.matmul %7, %8, %cst_8 {dimension_numbers = #tpu.dot_dimension_numbers<[1], [0], [0], [1], [0, 0, 1, 1], [], []>} : vector<16x10xf32>, vector<10x1xf32>, vector<16x1xf32> -> vector<16x1xf32>
    %c0_9 = arith.constant 0 : index
    %c0_10 = arith.constant 0 : index
    %10 = memref.load %arg5[%c0_9, %c0_10] : memref<1x1xf32, #tpu.memory_space<smem>>
    %11 = vector.broadcast %10 : f32 to vector<16x1xf32>
    %12 = arith.addf %9, %11 : vector<16x1xf32>
    %c0_11 = arith.constant 0 : index
    %c0_12 = arith.constant 0 : index
    %13 = vector.load %arg6[%c0_11, %c0_12] : memref<16x1xf32, #tpu.memory_space<vmem>>, vector<16x1xf32>
    tpu.vector_store %arg6[%c0_11, %c0_12], %12 {strides = array<i32>} : memref<16x1xf32, #tpu.memory_space<vmem>>, vector<16x1xf32>,
    return
  }
  func.func @transform_0(%arg0: i32) -> (i32, i32) {
    %c0_i32 = arith.constant 0 : i32
    %c0_i32_0 = arith.constant 0 : i32
    return %arg0, %c0_i32 : i32, i32
  }
  func.func @transform_1(%arg0: i32) -> (i32, i32) {
    %c0_i32 = arith.constant 0 : i32
    %c0_i32_0 = arith.constant 0 : i32
    %c0_i32_1 = arith.constant 0 : i32
    return %c0_i32, %c0_i32_0 : i32, i32
  }
  func.func @transform_2(%arg0: i32) -> (i32, i32) {
    %c0_i32 = arith.constant 0 : i32
    %c0_i32_0 = arith.constant 0 : i32
    %c0_i32_1 = arith.constant 0 : i32
    return %c0_i32, %c0_i32_0 : i32, i32
  }
  func.func @transform_3(%arg0: i32) -> (i32, i32) {
    %c0_i32 = arith.constant 0 : i32
    %c0_i32_0 = arith.constant 0 : i32
    %c0_i32_1 = arith.constant 0 : i32
    return %c0_i32, %c0_i32_0 : i32, i32
  }
  func.func @transform_4(%arg0: i32) -> (i32, i32) {
    %c0_i32 = arith.constant 0 : i32
    %c0_i32_0 = arith.constant 0 : i32
    %c0_i32_1 = arith.constant 0 : i32
    return %c0_i32, %c0_i32_0 : i32, i32
  }
  func.func @transform_5(%arg0: i32) -> (i32, i32) {
    %c0_i32 = arith.constant 0 : i32
    %c0_i32_0 = arith.constant 0 : i32
    return %arg0, %c0_i32 : i32, i32
  }
}

</mosaic_0001>

<llo_original>
// kernel: tpu_custom_call.1
$region0: #{tpu_custom_call.1}
  #allocation0 [shape = 'u32[]', space=smem, size = 0x4, offset = 0x4, fixed_abs, tag = 'smem constant byte address 0x4 - core index']
  #allocation1 [shape = 'u32[72,128]{1,0:T(1,128)}', space=vmem, size = 0x9000, scoped, tag = 'internal scratch']
  #allocation2 [shape = 'f32[1,1]{1,0:T(1,128)S(6)}', space=smem, size = 0x200, scoped, tag = 'scoped memory for tpu_custom_call.1']
  %s0 = inlined_call_operand.vmem [shape: f32[13,38], index: 0, kind: input, shape index: {}]
  %s1 = inlined_call_operand.vmem [shape: f32[38,10], index: 1, kind: input, shape index: {}]
  %s2 = inlined_call_operand.vmem [shape: f32[1,10], index: 2, kind: input, shape index: {}]
  %s3 = inlined_call_operand.vmem [shape: f32[10,1], index: 3, kind: input, shape index: {}]
  %s4 = inlined_call_operand.<no memory space> [shape: f32[1,1], index: 4, kind: input, shape index: {}]
  %s5 = inlined_call_operand.vmem [shape: f32[13,1], index: 5, kind: output, shape index: {}]
  %s6 = sld [smem:[#allocation0]]
  $region30: #{tpu_custom_call.1} parent=0
    _
  %s8 = ssub.s32 1, %s6
  %s9 = scalar_select 0, %s8, %s6
  %10 = sst [smem:[#allocation2]] %s4
  // Predicated region
  $region2: #{tpu_custom_call.1} parent=0 // pred_check
    _
  $region3: #{tpu_custom_call.1} parent=0 // pred_check_branch
    %12 = sbr.rel (0) target = $region5
  $region4: #{tpu_custom_call.1} parent=0 // pred_region
    _
  $region5: #{tpu_custom_call.1} parent=0 // pred_fallthru
    _
  // Predicated region
  $region6: #{tpu_custom_call.1} parent=0 // pred_check
    _
  $region7: #{tpu_custom_call.1} parent=0 // pred_check_branch
    %14 = sbr.rel (0) target = $region9
  $region8: #{tpu_custom_call.1} parent=0 // pred_region
    _
  $region9: #{tpu_custom_call.1} parent=0 // pred_fallthru
    _
  // Predicated region
  $region10: #{tpu_custom_call.1} parent=0 // pred_check
    _
  $region11: #{tpu_custom_call.1} parent=0 // pred_check_branch
    %16 = sbr.rel (0) target = $region13
  $region12: #{tpu_custom_call.1} parent=0 // pred_region
    _
  $region13: #{tpu_custom_call.1} parent=0 // pred_fallthru
    _
  // Predicated region
  $region14: #{tpu_custom_call.1} parent=0 // pred_check
    _
  $region15: #{tpu_custom_call.1} parent=0 // pred_check_branch
    %18 = sbr.rel (0) target = $region17
  $region16: #{tpu_custom_call.1} parent=0 // pred_region
    _
  $region17: #{tpu_custom_call.1} parent=0 // pred_fallthru
    _
  // Predicated region
  $region18: #{tpu_custom_call.1} parent=0 // pred_check
    _
  $region19: #{tpu_custom_call.1} parent=0 // pred_check_branch
    %20 = sbr.rel (0) target = $region21
  $region20: #{tpu_custom_call.1} parent=0 // pred_region
    _
  $region21: #{tpu_custom_call.1} parent=0 // pred_fallthru
    _
  %v21 = vld [vmem:[%s0] sm:$0xff]
  %v22 = vld [vmem:[%s0 + $0x8] sm:$0xff]
  %v23 = vld [vmem:[%s1] sm:$0xff]
  %v24 = vld [vmem:[%s1 + $0x8] sm:$0xff]
  %v25 = vld [vmem:[%s1 + $0x10] sm:$0xff]
  %v26 = vld [vmem:[%s1 + $0x18] sm:$0xff]
  %v27 = vld [vmem:[%s1 + $0x20] sm:$0x3f]
  %v28 = vld [vmem:[%s2] sm:$0x1]
  %v30 = vperm.slane %v28, 0
  %vm32 = vcmask 310272
  %v34 = vsel %vm32, %v21, 0
  %v37 = vsel %vm32, %v22, 0
  %vm39 = vcmask 1045504
  %v41 = vsel %vm39, %v27, 0
  %43 = vmatpush.msra.mxu0 0.0
  %44 = vmatpush.msra.mxu0 0.0
  %45 = vmatpush.msra.mxu0 0.0
  %46 = vmatpush.msra.mxu0 0.0
  %47 = vmatpush.msra.mxu0 0.0
  %48 = vmatpush.msra.mxu0 0.0
  %49 = vmatpush.msra.mxu0 0.0
  %50 = vmatpush.msra.mxu0 0.0
  %51 = vmatpush.msra.mxu0 0.0
  %52 = vmatpush.msra.mxu0 0.0
  %53 = vmatpush.msra.mxu0 0.0
  %54 = vmatpush.msra.mxu0 %v41
  %55 = vmatpush.msra.mxu0 %v26
  %56 = vmatpush.msra.mxu0 %v25
  %57 = vmatpush.msra.mxu0 %v24
  %58 = vmatpush.msra.mxu0 %v23
  %59 = vmatmul.f32.gmra.mxu0 %v34
  %v60 = vpop.f32.mrf.mxu0
  %v61 = vadd.f32 %v30, %v60
  %62 = vmatmul.f32.gmra.mxu0 %v37
  %v63 = vpop.f32.mrf.mxu0
  %v64 = vadd.f32 %v30, %v63
  %65 = vdwg.mxu0
  %v66 = vmax.f32 %v61, 0.0
  %v67 = vmax.f32 %v64, 0.0
  %v68 = vld [vmem:[%s3] sm:$0xff]
  %v69 = vld [vmem:[%s3 + $0x8] sm:$0x3]
  %s70 = sld [smem:[#allocation2]]
  %v71 = vstv %s70
  %vm72 = vcmask 80896
  %v74 = vsel %vm72, %v66, 0
  %v77 = vsel %vm72, %v67, 0
  %vm79 = vcmask 1041408
  %v81 = vsel %vm79, %v69, 0
  %83 = vmatpush.msra.mxu0 0.0
  %84 = vmatpush.msra.mxu0 0.0
  %85 = vmatpush.msra.mxu0 0.0
  %86 = vmatpush.msra.mxu0 0.0
  %87 = vmatpush.msra.mxu0 0.0
  %88 = vmatpush.msra.mxu0 0.0
  %89 = vmatpush.msra.mxu0 0.0
  %90 = vmatpush.msra.mxu0 0.0
  %91 = vmatpush.msra.mxu0 0.0
  %92 = vmatpush.msra.mxu0 0.0
  %93 = vmatpush.msra.mxu0 0.0
  %94 = vmatpush.msra.mxu0 0.0
  %95 = vmatpush.msra.mxu0 0.0
  %96 = vmatpush.msra.mxu0 0.0
  %97 = vmatpush.msra.mxu0 %v81
  %98 = vmatpush.msra.mxu0 %v68
  %99 = vmatmul.f32.gmra.mxu0 %v74
  %v100 = vpop.f32.mrf.mxu0
  %v101 = vadd.f32 %v71, %v100
  %102 = vmatmul.f32.gmra.mxu0 %v77
  %v103 = vpop.f32.mrf.mxu0
  %v104 = vadd.f32 %v71, %v103
  %105 = vdwg.mxu0
  %vm106 = vcmask 7168
  %107 = vst.msk [vmem:[%s5] sm:$0xff] %vm106, %v101
  %108 = vst.msk [vmem:[%s5 + $0x8] sm:$0xff] %vm106, %v104
  // Predicated region
  $region22: #{tpu_custom_call.1} parent=0 // pred_check
    _
  $region23: #{tpu_custom_call.1} parent=0 // pred_check_branch
    %110 = sbr.rel (0) target = $region25
  $region24: #{tpu_custom_call.1} parent=0 // pred_region
    _
  $region25: #{tpu_custom_call.1} parent=0 // pred_fallthru
    _
  // Predicated region
  $region26: #{tpu_custom_call.1} parent=0 // pred_check
    _
  $region27: #{tpu_custom_call.1} parent=0 // pred_check_branch
    %112 = sbr.rel (0) target = $region29
  $region28: #{tpu_custom_call.1} parent=0 // pred_region
    _
  $region29: #{tpu_custom_call.1} parent=0 // pred_fallthru
    _

</llo_original>
